<compile_context>
chip_gen: v6e
topology: v6e:2x2x1
jax: 0.10.0
libtpu: 0.0.40
codegen_flags: <defaults>
</compile_context>

<pallas_src>
import functools

import jax
import jax.numpy as jnp
from jax.experimental import pallas as pl
from jax.experimental.pallas import tpu as pltpu


def _logreg_kernel(w_ref, b_ref, x_ref, o_ref):
    """w_ref: (p,) f32 SMEM; b_ref: (1,) f32 SMEM;
    x_ref: (p, SB, 128) f32 VMEM; o_ref: (SB, 128) f32 VMEM."""
    p = x_ref.shape[0]
    # z = sum_i w_i * x_i + b  -- single FMA-chain expression, no zeros init.
    z = w_ref[0] * x_ref[0] + b_ref[0]
    for i in range(1, p):                      # p is a tiny static constant
        z = z + w_ref[i] * x_ref[i]
    # exp on the EUP; numerically clean sigmoid.
    o_ref[...] = jax.nn.sigmoid(z).astype(o_ref.dtype)


def _round_up(v, m):
    return -(-v // m) * m


@functools.partial(jax.jit, static_argnames=("block_rows",))
def logistic_regression_feature_major(xt, weight, bias, *, block_rows=2048):
    """xt: (p, N) feature-major input. Returns (N, 1) probabilities (f32).

    Use this entry point if the producer already has x feature-major: it skips
    the extra HBM transpose pass entirely.
    """
    p, n = xt.shape
    w = weight.reshape(p).astype(jnp.float32)
    b = bias.reshape(1).astype(jnp.float32)
    xt = xt.astype(jnp.float32)

    # Pad the sample axis only to a lane multiple (128), never to the tile size.
    n128 = _round_up(n, 128)
    if n128 != n:
        xt = jnp.pad(xt, ((0, 0), (0, n128 - n)))
    r = n128 // 128
    # Pure reshape (no data movement): sample s = row * 128 + lane.
    xt3 = xt.reshape(p, r, 128)

    # Sublane-block size: multiple of 8 (no sublane-padding waste); when more
    # than one minimal block exists, cap it so the grid has >= 2 steps so the
    # "parallel" axis can be sharded across both v7x TensorCores.
    if r <= 8:
        sb = r                                 # single block == full dim
    else:
        sb = min(block_rows, _round_up(-(-r // 2), 8))
    n_steps = pl.cdiv(r, sb)                   # ragged last block is clipped by Pallas

    # VMEM budget: double-buffered in/out blocks + headroom, under v7x's 64 MiB.
    in_block_bytes = p * sb * 128 * 4
    out_block_bytes = sb * 128 * 4
    vmem_bytes = 2 * (in_block_bytes + out_block_bytes) + (4 << 20)
    vmem_bytes = max(16 << 20, min(vmem_bytes, 56 << 20))

    out = pl.pallas_call(
        _logreg_kernel,
        out_shape=jax.ShapeDtypeStruct((r, 128), jnp.float32),
        grid=(n_steps,),
        in_specs=[
            # Scalars -> SMEM (scalar path, no padded VMEM tiles / extra DMAs).
            pl.BlockSpec(memory_space=pltpu.MemorySpace.SMEM),   # weight (p,)
            pl.BlockSpec(memory_space=pltpu.MemorySpace.SMEM),   # bias   (1,)
            # (p, SB, 128) lane+sublane-dense tile of repacked x^T.
            pl.BlockSpec((p, sb, 128), lambda i: (0, i, 0)),
        ],
        out_specs=pl.BlockSpec((sb, 128), lambda i: (i, 0)),
        compiler_params=pltpu.CompilerParams(
            dimension_semantics=("parallel",),
            vmem_limit_bytes=vmem_bytes,
        ),
    )(w, b, xt3)

    # Row-major flatten matches s = row*128 + lane; drop padding, restore (N, 1).
    return out.reshape(n128)[:n].reshape(n, 1)


@functools.partial(jax.jit, static_argnames=("block_rows",))
def logistic_regression(x, weight, bias, *, block_rows=2048):
    """x: (N, p) sample-major (torch layout), weight: (1, p), bias: (1,).

    Returns (N, 1) probabilities, matching the torch module's output.
    """
    # TODO(synk): if the producer can emit x feature-major (p, N), call
    # logistic_regression_feature_major directly and drop this transpose pass.
    xt = x.astype(jnp.float32).T
    return logistic_regression_feature_major(xt, weight, bias, block_rows=block_rows)


if __name__ == "__main__":
    # The surrounding script samples x = distrib.rsample().T with shape
    # (100, 2): N=100 samples, p=2 features, model = LogisticRegression(p=2).
    N, P = 100, 2

    key = jax.random.PRNGKey(0)
    kx, kw, kb = jax.random.split(key, 3)

    # Synthetic input (stand-in for the MultivariateNormal sample).
    x = jax.random.normal(kx, (N, P), dtype=jnp.float32)

    # Deterministic nn.Linear(p, 1)-style init: U(-1/sqrt(p), 1/sqrt(p)).
    bound = 1.0 / jnp.sqrt(jnp.float32(P))
    weight = jax.random.uniform(kw, (1, P), jnp.float32, -bound, bound)
    bias = jax.random.uniform(kb, (1,), jnp.float32, -bound, bound)

    prob = jax.block_until_ready(logistic_regression(x, weight, bias, block_rows=2048))
    ref = jax.nn.sigmoid(jnp.sum(x * weight, axis=1, keepdims=True) + bias)
    assert prob.shape == (N, 1)
    assert jnp.allclose(prob, ref, atol=1e-5, rtol=1e-5)

    # Also exercise the tiled path: multi-step grid with a ragged final block
    # (N=2500 -> 20 sublane-rows, 8-row blocks -> grid of 3, last block clipped).
    N2 = 2500
    x2 = jax.random.normal(kx, (N2, P), dtype=jnp.float32)
    prob2 = jax.block_until_ready(logistic_regression(x2, weight, bias, block_rows=8))
    ref2 = jax.nn.sigmoid(jnp.sum(x2 * weight, axis=1, keepdims=True) + bias)
    assert prob2.shape == (N2, 1)
    assert jnp.allclose(prob2, ref2, atol=1e-5, rtol=1e-5)

    print("KERNEL_OK")
</pallas_src>

<mosaic_0001>
module attributes {stable_mosaic.version = 11 : i64} {
  func.func @_logreg_kernel(%arg0: i32, %arg1: memref<2xf32, #tpu.memory_space<smem>>, %arg2: memref<1xf32, #tpu.memory_space<smem>>, %arg3: memref<2x1x128xf32, #tpu.memory_space<vmem>>, %arg4: memref<1x128xf32, #tpu.memory_space<vmem>>) attributes {dimension_semantics = [#tpu.dimension_semantics<parallel>], iteration_bounds = array<i64: 1>, scalar_prefetch = 0 : i64, scratch_operands = 0 : i64, tpu.core_type = #tpu.core_type<tc>, window_params = [{transform_indices = @transform_0, window_bounds = array<i64: 2>}, {transform_indices = @transform_1, window_bounds = array<i64: 1>}, {transform_indices = @transform_2, window_bounds = array<i64: 2, 1, 128>}, {transform_indices = @transform_3, window_bounds = array<i64: 1, 128>}]} {
    %c0 = arith.constant 0 : index
    %0 = memref.load %arg1[%c0] : memref<2xf32, #tpu.memory_space<smem>>
    %c0_0 = arith.constant 0 : index
    %c0_1 = arith.constant 0 : index
    %c0_2 = arith.constant 0 : index
    %1 = vector.load %arg3[%c0_0, %c0_1, %c0_2] : memref<2x1x128xf32, #tpu.memory_space<vmem>>, vector<1x1x128xf32>
    %2 = vector.shape_cast %1 : vector<1x1x128xf32> to vector<1x128xf32>
    %3 = vector.broadcast %0 : f32 to vector<1x128xf32>
    %4 = arith.mulf %3, %2 : vector<1x128xf32>
    %c0_3 = arith.constant 0 : index
    %5 = memref.load %arg2[%c0_3] : memref<1xf32, #tpu.memory_space<smem>>
    %6 = vector.broadcast %5 : f32 to vector<1x128xf32>
    %7 = arith.addf %4, %6 : vector<1x128xf32>
    %c1 = arith.constant 1 : index
    %8 = memref.load %arg1[%c1] : memref<2xf32, #tpu.memory_space<smem>>
    %c1_4 = arith.constant 1 : index
    %c0_5 = arith.constant 0 : index
    %c0_6 = arith.constant 0 : index
    %9 = vector.load %arg3[%c1_4, %c0_5, %c0_6] : memref<2x1x128xf32, #tpu.memory_space<vmem>>, vector<1x1x128xf32>
    %10 = vector.shape_cast %9 : vector<1x1x128xf32> to vector<1x128xf32>
    %11 = vector.broadcast %8 : f32 to vector<1x128xf32>
    %12 = arith.mulf %11, %10 : vector<1x128xf32>
    %13 = arith.addf %7, %12 : vector<1x128xf32>
    %14 = arith.negf %13 : vector<1x128xf32>
    %15 = math.exp %14 : vector<1x128xf32>
    %cst = arith.constant 1.000000e+00 : f32
    %16 = vector.broadcast %cst : f32 to vector<1x128xf32>
    %17 = arith.addf %16, %15 : vector<1x128xf32>
    %18 = arith.divf %16, %17 : vector<1x128xf32>
    %c0_7 = arith.constant 0 : index
    %c0_8 = arith.constant 0 : index
    %19 = vector.load %arg4[%c0_7, %c0_8] : memref<1x128xf32, #tpu.memory_space<vmem>>, vector<1x128xf32>
    tpu.vector_store %arg4[%c0_7, %c0_8], %18 {strides = array<i32>} : memref<1x128xf32, #tpu.memory_space<vmem>>, vector<1x128xf32>,
    return
  }
  func.func @transform_0(%arg0: i32) -> i32 {
    %c0_i32 = arith.constant 0 : i32
    %c0_i32_0 = arith.constant 0 : i32
    return %c0_i32 : i32
  }
  func.func @transform_1(%arg0: i32) -> i32 {
    %c0_i32 = arith.constant 0 : i32
    %c0_i32_0 = arith.constant 0 : i32
    return %c0_i32 : i32
  }
  func.func @transform_2(%arg0: i32) -> (i32, i32, i32) {
    %c0_i32 = arith.constant 0 : i32
    %c0_i32_0 = arith.constant 0 : i32
    %c0_i32_1 = arith.constant 0 : i32
    return %c0_i32, %arg0, %c0_i32_0 : i32, i32, i32
  }
  func.func @transform_3(%arg0: i32) -> (i32, i32) {
    %c0_i32 = arith.constant 0 : i32
    %c0_i32_0 = arith.constant 0 : i32
    return %arg0, %c0_i32 : i32, i32
  }
}

</mosaic_0001>

<llo_original>
// kernel: logistic_regression_feature_major.1
$region0: #{logistic_regression_feature_major.1}
  #allocation0 [shape = 'u32[]', space=smem, size = 0x4, offset = 0x4, fixed_abs, tag = 'smem constant byte address 0x4 - core index']
  #allocation1 [shape = 'u32[144,128]{1,0:T(1,128)}', space=vmem, size = 0x12000, scoped, tag = 'internal scratch']
  #allocation2 [shape = 'f32[1]{0:T(128)S(6)}', space=smem, size = 0x200, scoped, tag = 'scoped memory for logistic_regression_feature_major.1']
  %s0 = inlined_call_operand.vmem [shape: f32[2], index: 0, kind: input, shape index: {}]
  %s1 = inlined_call_operand.<no memory space> [shape: f32[1], index: 1, kind: input, shape index: {}]
  %s2 = inlined_call_operand.vmem [shape: f32[2,1,128], index: 2, kind: input, shape index: {}]
  %s3 = inlined_call_operand.vmem [shape: f32[1,128], index: 3, kind: output, shape index: {}]
  %s4 = sld [smem:[#allocation0]]
  $region26: #{logistic_regression_feature_major.1} parent=0
    _
  %s6 = ssub.s32 1, %s4
  %s7 = scalar_select 0, %s6, %s4
  %8 = sst [smem:[#allocation2]] %s1
  $region1: #{logistic_regression_feature_major.1} parent=0
    #allocation3 [shape = 'u8[512]{0}', space=smem, size = 0x200, scoped, tag = 'input window, operand 0, single buffered']
    #allocation4 [shape = 's32[1]{0}', space=sflag, size = 0x4, scoped, tag = 'scoped memory for logistic_regression_feature_major.1']
    %9 = vsyncpa [#allocation4], 0
    // Predicated region
    $region2: #{logistic_regression_feature_major.1} parent=1 // pred_check
      _
    $region3: #{logistic_regression_feature_major.1} parent=1 // pred_check_branch
      %11 = sbr.rel (0) target = $region5
    $region4: #{logistic_regression_feature_major.1} parent=1 // pred_region
      %s13 = ssub.s32 16, 16
      %14 = vsyncadd [#allocation4], %s13
      %s16 = sshll.u32 %s0, 4
      %s17 = int_to_ptr.vmem [resolvable:$true] %s16
      %19 = dma.vmem_to_smem %s17, 16, [#allocation3], [#allocation4]
    $region5: #{logistic_regression_feature_major.1} parent=1 // pred_fallthru
      _
    // Predicated region
    $region6: #{logistic_regression_feature_major.1} parent=1 // pred_check
      _
    $region7: #{logistic_regression_feature_major.1} parent=1 // pred_check_branch
      %21 = sbr.rel (0) target = $region9
    $region8: #{logistic_regression_feature_major.1} parent=1 // pred_region
      _
    $region9: #{logistic_regression_feature_major.1} parent=1 // pred_fallthru
      _
    // Predicated region
    $region10: #{logistic_regression_feature_major.1} parent=1 // pred_check
      _
    $region11: #{logistic_regression_feature_major.1} parent=1 // pred_check_branch
      %23 = sbr.rel (0) target = $region13
    $region12: #{logistic_regression_feature_major.1} parent=1 // pred_region
      _
    $region13: #{logistic_regression_feature_major.1} parent=1 // pred_fallthru
      _
    // Predicated region
    $region14: #{logistic_regression_feature_major.1} parent=1 // pred_check
      _
    $region15: #{logistic_regression_feature_major.1} parent=1 // pred_check_branch
      %25 = sbr.rel (0) target = $region17
    $region16: #{logistic_regression_feature_major.1} parent=1 // pred_region
      %26 = dma.done [#allocation4], 16
    $region17: #{logistic_regression_feature_major.1} parent=1 // pred_fallthru
      _
    %27 = sfence
    %s28 = sld [smem:[#allocation3]]
    %v29 = vld [vmem:[%s2] sm:$0x1]
    %v30 = vstv %s28
    %v31 = vmul.f32 %v30, %v29
    %s32 = sld [smem:[#allocation2]]
    %v33 = vstv %s32
    %v34 = vadd.f32 %v31, %v33
    %s35 = sld [smem:[#allocation3 + $0x1]]
    %s36 = scalar_lea.vmem %s2, 1
    %v37 = vld [vmem:[%s36] sm:$0x1]
    %v38 = vstv %s35
    %v39 = vmul.f32 %v38, %v37
    %v40 = vadd.f32 %v34, %v39
    %v41 = vxor.u32 %v40, 2147483648
    %v42 = vmul.f32 %v41, 1.442695
    %v43 = vpow.pop %v42
    %v44 = vadd.f32 %v43, 1.0
    %v45 = vrcp.pop %v44
    %v46 = vmul.f32 1.0, %v45
    %47 = vst [vmem:[%s3] sm:$0x1] %v46
    // Predicated region
    $region18: #{logistic_regression_feature_major.1} parent=1 // pred_check
      _
    $region19: #{logistic_regression_feature_major.1} parent=1 // pred_check_branch
      %49 = sbr.rel (0) target = $region21
    $region20: #{logistic_regression_feature_major.1} parent=1 // pred_region
      _
    $region21: #{logistic_regression_feature_major.1} parent=1 // pred_fallthru
      _
    // Predicated region
    $region22: #{logistic_regression_feature_major.1} parent=1 // pred_check
      _
    $region23: #{logistic_regression_feature_major.1} parent=1 // pred_check_branch
      %51 = sbr.rel (0) target = $region25
    $region24: #{logistic_regression_feature_major.1} parent=1 // pred_region
      _
    $region25: #{logistic_regression_feature_major.1} parent=1 // pred_fallthru
      _
    %52 = vsyncpa [#allocation4], 1

</llo_original>
